<compile_context>
chip_gen: v5e
topology: v5e:2x2
jax: 0.10.0
libtpu: 0.0.40
codegen_flags: <defaults>
</compile_context>

<pallas_src>
import jax
import jax.numpy as jnp
from jax.experimental import pallas as pl
from jax.experimental.pallas import tpu as pltpu

IN_F = 2        # input/output feature width of the MLP (fixed by the module)
SUB = 8         # hidden feature padding (sublane multiple)
CHUNK = 512     # inner lane-chunk size (multiple of 128)
TB_MAX = 2048   # max batch-lane tile (multiple of CHUNK); sweep 2048-8192


def _round_up(n, m):
    return ((n + m - 1) // m) * m


def _make_mlp_kernel(num_layers, nchunks, chunk):
    """Kernel for one (2, TB) batch tile, processed in `nchunks` lane chunks."""

    def kernel(*refs):
        x_ref = refs[0]
        out_ref = refs[-1]
        wb = refs[1:-1]                         # alternating (w, b) refs
        # Load resident params once per tile (hoisted out of the chunk loop).
        ws = [wb[2 * li][...] for li in range(num_layers)]
        bs = [wb[2 * li + 1][...] for li in range(num_layers)]
        for c in range(nchunks):                # static -> fully unrolled
            start = c * chunk                   # static chunk offset
            h = x_ref[:, pl.ds(start, chunk)]   # (2, chunk) f32
            for li in range(num_layers):
                h = jnp.dot(ws[li], h, preferred_element_type=jnp.float32) + bs[li]
                if li < num_layers - 1:
                    h = jnp.tanh(h)             # EUP slot
            out_ref[:, pl.ds(start, chunk)] = h.astype(out_ref.dtype)

    return kernel


def xavier_uniform(key, out_f, in_f, dtype=jnp.float32):
    """torch.nn.init.xavier_uniform_ for a (out_f, in_f) Linear weight."""
    bound = float(jnp.sqrt(6.0 / (in_f + out_f)))
    return jax.random.uniform(key, (out_f, in_f), dtype, -bound, bound)


def init_dnn_params(key, hidden_sizes):
    """Params matching DNN(hidden_sizes, nn.Tanh) init (xavier weights, zero bias)."""
    sizes = [IN_F] + list(hidden_sizes) + [IN_F]
    params = []
    for i in range(len(sizes) - 1):
        key, sub = jax.random.split(key)
        w = xavier_uniform(sub, sizes[i + 1], sizes[i])   # (out, in) like torch
        b = jnp.zeros((sizes[i + 1],), jnp.float32)
        params.append((w, b))
    return params


def prepare_params(params):
    """Pad params to TPU-friendly feature-major tiles ONCE (hoisted out of forward).

    First-layer input dim stays 2 and last-layer output dim stays 2; hidden
    widths are zero-padded up to a multiple of 8.  Zero weight rows/cols plus
    zero bias keep padded features exactly zero through tanh (tanh(0)=0), so
    results are unaffected.
    """
    n_layers = len(params)
    flat = []
    for idx, (w, b) in enumerate(params):
        out_f, in_f = w.shape
        in_pad = in_f if idx == 0 else _round_up(in_f, SUB)
        out_pad = out_f if idx == n_layers - 1 else _round_up(out_f, SUB)
        wp = jnp.pad(w, ((0, out_pad - out_f), (0, in_pad - in_f)))
        bp_ = jnp.pad(b.reshape(out_f, 1), ((0, out_pad - out_f), (0, 0)))
        flat += [wp, bp_]
    return tuple(flat)


def _pick_tiles(n):
    """Choose (batch tile, padded batch, inner chunk). Tile is a multiple of chunk."""
    bp_min = _round_up(max(n, 1), 128)
    if bp_min <= CHUNK:
        tb = bp_min                        # one small tile; chunk == tile
    elif bp_min < 2 * TB_MAX:
        # Aim for >=2 grid steps so both v7x TensorCores get work.
        tb = min(TB_MAX, _round_up((bp_min + 1) // 2, CHUNK))
    else:
        tb = TB_MAX
    chunk = min(CHUNK, tb)
    bp = _round_up(n, tb)
    return tb, bp, chunk


@jax.jit
def dnn_forward(x, *wb_padded):
    """x: (N, 2) f32, wb_padded: pre-padded (w, b, w, b, ...) from prepare_params.

    Returns (u, v), each (N,), mirroring `return (x[:, 0], x[:, 1])`.
    """
    n = x.shape[0]
    n_layers = len(wb_padded) // 2
    tb, bp, chunk = _pick_tiles(n)

    # Feature-major, lane-dense input: (2, Bp); columns >= N are zero padding.
    # TODO(synk): if the surrounding (PINN) pipeline can keep x as (2, N)
    # end-to-end, this transpose/pad and the final slices become free.
    xt = jnp.pad(x.T, ((0, 0), (0, bp - n)))

    in_specs = [pl.BlockSpec((IN_F, tb), lambda i: (0, i))]
    flops = 0
    trans = 0
    param_bytes = 0
    for li in range(n_layers):
        w = wb_padded[2 * li]
        b = wb_padded[2 * li + 1]
        # Resident params (constant index map).  Block == full array dims, so
        # the (8,128) BlockSpec rule is satisfied for any padded width.
        in_specs.append(pl.BlockSpec(w.shape, lambda i: (0, 0)))
        in_specs.append(pl.BlockSpec(b.shape, lambda i: (0, 0)))
        out_p, in_p = w.shape
        flops += 2 * out_p * in_p * bp
        if li < n_layers - 1:
            trans += out_p * bp
        param_bytes += (w.size + b.size) * 4

    out_specs = pl.BlockSpec((IN_F, tb), lambda i: (0, i))

    cost = pl.CostEstimate(
        flops=flops,
        transcendentals=trans,
        bytes_accessed=2 * IN_F * bp * 4 + param_bytes,
    )

    out = pl.pallas_call(
        _make_mlp_kernel(n_layers, tb // chunk, chunk),
        out_shape=jax.ShapeDtypeStruct((IN_F, bp), jnp.float32),
        grid=(bp // tb,),
        in_specs=in_specs,
        out_specs=out_specs,
        compiler_params=pltpu.CompilerParams(
            dimension_semantics=("parallel",),   # shard batch tiles across TCs
        ),
        cost_estimate=cost,
    )(xt, *wb_padded)

    return out[0, :n], out[1, :n]


def dnn_reference(x, params):
    """Pure-JAX reference for correctness checking."""
    h = x
    for i, (w, b) in enumerate(params):
        h = h @ w.T + b
        if i < len(params) - 1:
            h = jnp.tanh(h)
    return h[:, 0], h[:, 1]


if __name__ == "__main__":
    m = 50                     # module-level constant from the original spec
    hidden_sizes = [m, m]      # 50 -> padded to 56 (exercises the pad path)

    key = jax.random.PRNGKey(0)
    pkey, xkey = jax.random.split(key)
    params = init_dnn_params(pkey, hidden_sizes)
    padded = prepare_params(params)

    # n=8: single small tile; n=1000: two-tile grid; n=4100: multi-tile grid
    # with the 4-chunk inner lane loop.
    for n in (8, 1000, 4100):
        xkey, sub = jax.random.split(xkey)
        x = jax.random.normal(sub, (n, IN_F), jnp.float32)

        u, v = dnn_forward(x, *padded)
        jax.block_until_ready((u, v))

        u_ref, v_ref = dnn_reference(x, params)
        assert u.shape == (n,) and v.shape == (n,)
        assert jnp.allclose(u, u_ref, atol=1e-5, rtol=1e-5)
        assert jnp.allclose(v, v_ref, atol=1e-5, rtol=1e-5)

    print("KERNEL_OK")
</pallas_src>

<mosaic_0001>
module attributes {stable_mosaic.version = 11 : i64} {
  func.func @kernel(%arg0: i32, %arg1: memref<2x128xf32, #tpu.memory_space<vmem>>, %arg2: memref<56x2xf32, #tpu.memory_space<vmem>>, %arg3: memref<56x1xf32, #tpu.memory_space<vmem>>, %arg4: memref<56x56xf32, #tpu.memory_space<vmem>>, %arg5: memref<56x1xf32, #tpu.memory_space<vmem>>, %arg6: memref<2x56xf32, #tpu.memory_space<vmem>>, %arg7: memref<2x1xf32, #tpu.memory_space<vmem>>, %arg8: memref<2x128xf32, #tpu.memory_space<vmem>>) attributes {dimension_semantics = [#tpu.dimension_semantics<parallel>], iteration_bounds = array<i64: 1>, scalar_prefetch = 0 : i64, scratch_operands = 0 : i64, tpu.core_type = #tpu.core_type<tc>, window_params = [{transform_indices = @transform_0, window_bounds = array<i64: 2, 128>}, {pipeline_mode = #tpu.pipeline_mode<synchronous>, transform_indices = @transform_1, window_bounds = array<i64: 56, 2>}, {pipeline_mode = #tpu.pipeline_mode<synchronous>, transform_indices = @transform_2, window_bounds = array<i64: 56, 1>}, {pipeline_mode = #tpu.pipeline_mode<synchronous>, transform_indices = @transform_3, window_bounds = array<i64: 56, 56>}, {pipeline_mode = #tpu.pipeline_mode<synchronous>, transform_indices = @transform_4, window_bounds = array<i64: 56, 1>}, {pipeline_mode = #tpu.pipeline_mode<synchronous>, transform_indices = @transform_5, window_bounds = array<i64: 2, 56>}, {pipeline_mode = #tpu.pipeline_mode<synchronous>, transform_indices = @transform_6, window_bounds = array<i64: 2, 1>}, {transform_indices = @transform_7, window_bounds = array<i64: 2, 128>}]} {
    %c0 = arith.constant 0 : index
    %c0_0 = arith.constant 0 : index
    %0 = vector.load %arg2[%c0, %c0_0] : memref<56x2xf32, #tpu.memory_space<vmem>>, vector<56x2xf32>
    %c0_1 = arith.constant 0 : index
    %c0_2 = arith.constant 0 : index
    %1 = vector.load %arg4[%c0_1, %c0_2] : memref<56x56xf32, #tpu.memory_space<vmem>>, vector<56x56xf32>
    %c0_3 = arith.constant 0 : index
    %c0_4 = arith.constant 0 : index
    %2 = vector.load %arg6[%c0_3, %c0_4] : memref<2x56xf32, #tpu.memory_space<vmem>>, vector<2x56xf32>
    %c0_5 = arith.constant 0 : index
    %c0_6 = arith.constant 0 : index
    %3 = vector.load %arg3[%c0_5, %c0_6] : memref<56x1xf32, #tpu.memory_space<vmem>>, vector<56x1xf32>
    %c0_7 = arith.constant 0 : index
    %c0_8 = arith.constant 0 : index
    %4 = vector.load %arg5[%c0_7, %c0_8] : memref<56x1xf32, #tpu.memory_space<vmem>>, vector<56x1xf32>
    %c0_9 = arith.constant 0 : index
    %c0_10 = arith.constant 0 : index
    %5 = vector.load %arg7[%c0_9, %c0_10] : memref<2x1xf32, #tpu.memory_space<vmem>>, vector<2x1xf32>
    %c0_11 = arith.constant 0 : index
    %c0_12 = arith.constant 0 : index
    %6 = vector.load %arg1[%c0_11, %c0_12] : memref<2x128xf32, #tpu.memory_space<vmem>>, vector<2x128xf32>
    %cst = arith.constant dense<0.000000e+00> : vector<56x128xf32>
    %7 = tpu.matmul %0, %6, %cst {dimension_numbers = #tpu.dot_dimension_numbers<[1], [0], [0], [1], [0, 0, 1, 1], [], []>} : vector<56x2xf32>, vector<2x128xf32>, vector<56x128xf32> -> vector<56x128xf32>
    %8 = vector.broadcast %3 : vector<56x1xf32> to vector<56x128xf32>
    %9 = arith.addf %7, %8 : vector<56x128xf32>
    %10 = math.tanh %9 : vector<56x128xf32>
    %cst_13 = arith.constant dense<0.000000e+00> : vector<56x128xf32>
    %11 = tpu.matmul %1, %10, %cst_13 {dimension_numbers = #tpu.dot_dimension_numbers<[1], [0], [0], [1], [0, 0, 1, 1], [], []>} : vector<56x56xf32>, vector<56x128xf32>, vector<56x128xf32> -> vector<56x128xf32>
    %12 = vector.broadcast %4 : vector<56x1xf32> to vector<56x128xf32>
    %13 = arith.addf %11, %12 : vector<56x128xf32>
    %14 = math.tanh %13 : vector<56x128xf32>
    %cst_14 = arith.constant dense<0.000000e+00> : vector<2x128xf32>
    %15 = tpu.matmul %2, %14, %cst_14 {dimension_numbers = #tpu.dot_dimension_numbers<[1], [0], [0], [1], [0, 0, 1, 1], [], []>} : vector<2x56xf32>, vector<56x128xf32>, vector<2x128xf32> -> vector<2x128xf32>
    %16 = vector.broadcast %5 : vector<2x1xf32> to vector<2x128xf32>
    %17 = arith.addf %15, %16 : vector<2x128xf32>
    %c0_15 = arith.constant 0 : index
    %c0_16 = arith.constant 0 : index
    %18 = vector.load %arg8[%c0_15, %c0_16] : memref<2x128xf32, #tpu.memory_space<vmem>>, vector<2x128xf32>
    tpu.vector_store %arg8[%c0_15, %c0_16], %17 {strides = array<i32>} : memref<2x128xf32, #tpu.memory_space<vmem>>, vector<2x128xf32>,
    return
  }
  func.func @transform_0(%arg0: i32) -> (i32, i32) {
    %c0_i32 = arith.constant 0 : i32
    %c0_i32_0 = arith.constant 0 : i32
    return %c0_i32, %arg0 : i32, i32
  }
  func.func @transform_1(%arg0: i32) -> (i32, i32) {
    %c0_i32 = arith.constant 0 : i32
    %c0_i32_0 = arith.constant 0 : i32
    %c0_i32_1 = arith.constant 0 : i32
    return %c0_i32, %c0_i32_0 : i32, i32
  }
  func.func @transform_2(%arg0: i32) -> (i32, i32) {
    %c0_i32 = arith.constant 0 : i32
    %c0_i32_0 = arith.constant 0 : i32
    %c0_i32_1 = arith.constant 0 : i32
    return %c0_i32, %c0_i32_0 : i32, i32
  }
  func.func @transform_3(%arg0: i32) -> (i32, i32) {
    %c0_i32 = arith.constant 0 : i32
    %c0_i32_0 = arith.constant 0 : i32
    %c0_i32_1 = arith.constant 0 : i32
    return %c0_i32, %c0_i32_0 : i32, i32
  }
  func.func @transform_4(%arg0: i32) -> (i32, i32) {
    %c0_i32 = arith.constant 0 : i32
    %c0_i32_0 = arith.constant 0 : i32
    %c0_i32_1 = arith.constant 0 : i32
    return %c0_i32, %c0_i32_0 : i32, i32
  }
  func.func @transform_5(%arg0: i32) -> (i32, i32) {
    %c0_i32 = arith.constant 0 : i32
    %c0_i32_0 = arith.constant 0 : i32
    %c0_i32_1 = arith.constant 0 : i32
    return %c0_i32, %c0_i32_0 : i32, i32
  }
  func.func @transform_6(%arg0: i32) -> (i32, i32) {
    %c0_i32 = arith.constant 0 : i32
    %c0_i32_0 = arith.constant 0 : i32
    %c0_i32_1 = arith.constant 0 : i32
    return %c0_i32, %c0_i32_0 : i32, i32
  }
  func.func @transform_7(%arg0: i32) -> (i32, i32) {
    %c0_i32 = arith.constant 0 : i32
    %c0_i32_0 = arith.constant 0 : i32
    return %c0_i32, %arg0 : i32, i32
  }
}

</mosaic_0001>

<llo_original>
// kernel: dnn_forward.1
$region0: #{dnn_forward.1}
  #allocation0 [shape = 'u32[]', space=smem, size = 0x4, offset = 0x4, fixed_abs, tag = 'smem constant byte address 0x4 - core index']
  #allocation1 [shape = 'u32[72,128]{1,0:T(1,128)}', space=vmem, size = 0x9000, scoped, tag = 'internal scratch']
  %s0 = inlined_call_operand.vmem [shape: f32[2,128], index: 0, kind: input, shape index: {}]
  %s1 = inlined_call_operand.vmem [shape: f32[56,2], index: 1, kind: input, shape index: {}]
  %s2 = inlined_call_operand.vmem [shape: f32[56,1], index: 2, kind: input, shape index: {}]
  %s3 = inlined_call_operand.vmem [shape: f32[56,56], index: 3, kind: input, shape index: {}]
  %s4 = inlined_call_operand.vmem [shape: f32[56,1], index: 4, kind: input, shape index: {}]
  %s5 = inlined_call_operand.vmem [shape: f32[2,56], index: 5, kind: input, shape index: {}]
  %s6 = inlined_call_operand.vmem [shape: f32[2,1], index: 6, kind: input, shape index: {}]
  %s7 = inlined_call_operand.vmem [shape: f32[2,128], index: 7, kind: output, shape index: {}]
  %s8 = sld [smem:[#allocation0]]
  $region38: #{dnn_forward.1} parent=0
    _
  %s10 = ssub.s32 1, %s8
  %s11 = scalar_select 0, %s10, %s8
  // Predicated region
  $region2: #{dnn_forward.1} parent=0 // pred_check
    _
  $region3: #{dnn_forward.1} parent=0 // pred_check_branch
    %13 = sbr.rel (0) target = $region5
  $region4: #{dnn_forward.1} parent=0 // pred_region
    _
  $region5: #{dnn_forward.1} parent=0 // pred_fallthru
    _
  // Predicated region
  $region6: #{dnn_forward.1} parent=0 // pred_check
    _
  $region7: #{dnn_forward.1} parent=0 // pred_check_branch
    %15 = sbr.rel (0) target = $region9
  $region8: #{dnn_forward.1} parent=0 // pred_region
    _
  $region9: #{dnn_forward.1} parent=0 // pred_fallthru
    _
  // Predicated region
  $region10: #{dnn_forward.1} parent=0 // pred_check
    _
  $region11: #{dnn_forward.1} parent=0 // pred_check_branch
    %17 = sbr.rel (0) target = $region13
  $region12: #{dnn_forward.1} parent=0 // pred_region
    _
  $region13: #{dnn_forward.1} parent=0 // pred_fallthru
    _
  // Predicated region
  $region14: #{dnn_forward.1} parent=0 // pred_check
    _
  $region15: #{dnn_forward.1} parent=0 // pred_check_branch
    %19 = sbr.rel (0) target = $region17
  $region16: #{dnn_forward.1} parent=0 // pred_region
    _
  $region17: #{dnn_forward.1} parent=0 // pred_fallthru
    _
  // Predicated region
  $region18: #{dnn_forward.1} parent=0 // pred_check
    _
  $region19: #{dnn_forward.1} parent=0 // pred_check_branch
    %21 = sbr.rel (0) target = $region21
  $region20: #{dnn_forward.1} parent=0 // pred_region
    _
  $region21: #{dnn_forward.1} parent=0 // pred_fallthru
    _
  // Predicated region
  $region22: #{dnn_forward.1} parent=0 // pred_check
    _
  $region23: #{dnn_forward.1} parent=0 // pred_check_branch
    %23 = sbr.rel (0) target = $region25
  $region24: #{dnn_forward.1} parent=0 // pred_region
    _
  $region25: #{dnn_forward.1} parent=0 // pred_fallthru
    _
  // Predicated region
  $region26: #{dnn_forward.1} parent=0 // pred_check
    _
  $region27: #{dnn_forward.1} parent=0 // pred_check_branch
    %25 = sbr.rel (0) target = $region29
  $region28: #{dnn_forward.1} parent=0 // pred_region
    _
  $region29: #{dnn_forward.1} parent=0 // pred_fallthru
    _
  %v26 = vld [vmem:[%s1] sm:$0xff]
  %v27 = vld [vmem:[%s1 + $0x8] sm:$0xff]
  %v28 = vld [vmem:[%s1 + $0x10] sm:$0xff]
  %v29 = vld [vmem:[%s1 + $0x18] sm:$0xff]
  %v30 = vld [vmem:[%s1 + $0x20] sm:$0xff]
  %v31 = vld [vmem:[%s1 + $0x28] sm:$0xff]
  %v32 = vld [vmem:[%s1 + $0x30] sm:$0xff]
  %v33 = vld [vmem:[%s3] sm:$0xff]
  %v34 = vld [vmem:[%s3 + $0x8] sm:$0xff]
  %v35 = vld [vmem:[%s3 + $0x10] sm:$0xff]
  %v36 = vld [vmem:[%s3 + $0x18] sm:$0xff]
  %v37 = vld [vmem:[%s3 + $0x20] sm:$0xff]
  %v38 = vld [vmem:[%s3 + $0x28] sm:$0xff]
  %v39 = vld [vmem:[%s3 + $0x30] sm:$0xff]
  %v40 = vld [vmem:[%s5] sm:$0x3]
  %v41 = vld [vmem:[%s2] sm:$0xff]
  %v42 = vld [vmem:[%s2 + $0x8] sm:$0xff]
  %v43 = vld [vmem:[%s2 + $0x10] sm:$0xff]
  %v44 = vld [vmem:[%s2 + $0x18] sm:$0xff]
  %v45 = vld [vmem:[%s2 + $0x20] sm:$0xff]
  %v46 = vld [vmem:[%s2 + $0x28] sm:$0xff]
  %v47 = vld [vmem:[%s2 + $0x30] sm:$0xff]
  %v48 = vld [vmem:[%s4] sm:$0xff]
  %v49 = vld [vmem:[%s4 + $0x8] sm:$0xff]
  %v50 = vld [vmem:[%s4 + $0x10] sm:$0xff]
  %v51 = vld [vmem:[%s4 + $0x18] sm:$0xff]
  %v52 = vld [vmem:[%s4 + $0x20] sm:$0xff]
  %v53 = vld [vmem:[%s4 + $0x28] sm:$0xff]
  %v54 = vld [vmem:[%s4 + $0x30] sm:$0xff]
  %v55 = vld [vmem:[%s6] sm:$0x3]
  %v56 = vld [vmem:[%s0] sm:$0x3]
  %58 = vset.pattern.permute.xlu0 0
  %59 = vperm.xlu0 %58, %v41
  %v60 = vpop.permute.xlu0 %59
  %63 = vset.pattern.permute.xlu0 0
  %64 = vperm.xlu0 %63, %v42
  %v65 = vpop.permute.xlu0 %64
  %68 = vset.pattern.permute.xlu0 0
  %69 = vperm.xlu0 %68, %v43
  %v70 = vpop.permute.xlu0 %69
  %73 = vset.pattern.permute.xlu0 0
  %74 = vperm.xlu0 %73, %v44
  %v75 = vpop.permute.xlu0 %74
  %78 = vset.pattern.permute.xlu0 0
  %79 = vperm.xlu0 %78, %v45
  %v80 = vpop.permute.xlu0 %79
  %83 = vset.pattern.permute.xlu0 0
  %84 = vperm.xlu0 %83, %v46
  %v85 = vpop.permute.xlu0 %84
  %88 = vset.pattern.permute.xlu0 0
  %89 = vperm.xlu0 %88, %v47
  %v90 = vpop.permute.xlu0 %89
  %vm92 = vcmask 15360
  %v94 = vsel %vm92, %v26, 0
  %v97 = vsel %vm92, %v27, 0
  %v100 = vsel %vm92, %v28, 0
  %v103 = vsel %vm92, %v29, 0
  %v106 = vsel %vm92, %v30, 0
  %v109 = vsel %vm92, %v31, 0
  %v112 = vsel %vm92, %v32, 0
  %vm114 = vcmask 1041408
  %v116 = vsel %vm114, %v56, 0
  %118 = vmatpush.msra.mxu0 0.0
  %119 = vmatpush.msra.mxu0 0.0
  %120 = vmatpush.msra.mxu0 0.0
  %121 = vmatpush.msra.mxu0 0.0
  %122 = vmatpush.msra.mxu0 0.0
  %123 = vmatpush.msra.mxu0 0.0
  %124 = vmatpush.msra.mxu0 0.0
  %125 = vmatpush.msra.mxu0 0.0
  %126 = vmatpush.msra.mxu0 0.0
  %127 = vmatpush.msra.mxu0 0.0
  %128 = vmatpush.msra.mxu0 0.0
  %129 = vmatpush.msra.mxu0 0.0
  %130 = vmatpush.msra.mxu0 0.0
  %131 = vmatpush.msra.mxu0 0.0
  %132 = vmatpush.msra.mxu0 0.0
  %133 = vmatpush.msra.mxu0 %v116
  %134 = vmatmul.f32.gmra.mxu0 %v94
  %v135 = vpop.f32.mrf.mxu0
  %v136 = vadd.f32 %v60, %v135
  %137 = vmatmul.f32.gmra.mxu0 %v97
  %v138 = vpop.f32.mrf.mxu0
  %v139 = vadd.f32 %v65, %v138
  %140 = vmatmul.f32.gmra.mxu0 %v100
  %v141 = vpop.f32.mrf.mxu0
  %v142 = vadd.f32 %v70, %v141
  %143 = vmatmul.f32.gmra.mxu0 %v103
  %v144 = vpop.f32.mrf.mxu0
  %v145 = vadd.f32 %v75, %v144
  %146 = vmatmul.f32.gmra.mxu0 %v106
  %v147 = vpop.f32.mrf.mxu0
  %v148 = vadd.f32 %v80, %v147
  %149 = vmatmul.f32.gmra.mxu0 %v109
  %v150 = vpop.f32.mrf.mxu0
  %v151 = vadd.f32 %v85, %v150
  %152 = vmatmul.f32.gmra.mxu0 %v112
  %v153 = vpop.f32.mrf.mxu0
  %v154 = vadd.f32 %v90, %v153
  %155 = vdwg.mxu0
  %v156 = vtanh.pop %v136
  %v157 = vtanh.pop %v139
  %v158 = vtanh.pop %v142
  %v159 = vtanh.pop %v145
  %v160 = vtanh.pop %v148
  %v161 = vtanh.pop %v151
  %v162 = vtanh.pop %v154
  %164 = vset.pattern.permute.xlu0 0
  %165 = vperm.xlu0 %164, %v48
  %v166 = vpop.permute.xlu0 %165
  %169 = vset.pattern.permute.xlu0 0
  %170 = vperm.xlu0 %169, %v49
  %v171 = vpop.permute.xlu0 %170
  %174 = vset.pattern.permute.xlu0 0
  %175 = vperm.xlu0 %174, %v50
  %v176 = vpop.permute.xlu0 %175
  %179 = vset.pattern.permute.xlu0 0
  %180 = vperm.xlu0 %179, %v51
  %v181 = vpop.permute.xlu0 %180
  %184 = vset.pattern.permute.xlu0 0
  %185 = vperm.xlu0 %184, %v52
  %v186 = vpop.permute.xlu0 %185
  %189 = vset.pattern.permute.xlu0 0
  %190 = vperm.xlu0 %189, %v53
  %v191 = vpop.permute.xlu0 %190
  %194 = vset.pattern.permute.xlu0 0
  %195 = vperm.xlu0 %194, %v54
  %v196 = vpop.permute.xlu0 %195
  %vm198 = vcmask 457728
  %v200 = vsel %vm198, %v33, 0
  %v203 = vsel %vm198, %v34, 0
  %v206 = vsel %vm198, %v35, 0
  %v209 = vsel %vm198, %v36, 0
  %v212 = vsel %vm198, %v37, 0
  %v215 = vsel %vm198, %v38, 0
  %v218 = vsel %vm198, %v39, 0
  %220 = vmatpush.msra.mxu0 0.0
  %221 = vmatpush.msra.mxu0 0.0
  %222 = vmatpush.msra.mxu0 0.0
  %223 = vmatpush.msra.mxu0 0.0
  %224 = vmatpush.msra.mxu0 0.0
  %225 = vmatpush.msra.mxu0 0.0
  %226 = vmatpush.msra.mxu0 0.0
  %227 = vmatpush.msra.mxu0 0.0
  %228 = vmatpush.msra.mxu0 0.0
  %229 = vmatpush.msra.mxu0 %v162
  %230 = vmatpush.msra.mxu0 %v161
  %231 = vmatpush.msra.mxu0 %v160
  %232 = vmatpush.msra.mxu0 %v159
  %233 = vmatpush.msra.mxu0 %v158
  %234 = vmatpush.msra.mxu0 %v157
  %235 = vmatpush.msra.mxu0 %v156
  %236 = vmatmul.f32.gmra.mxu0 %v200
  %v237 = vpop.f32.mrf.mxu0
  %v238 = vadd.f32 %v166, %v237
  %239 = vmatmul.f32.gmra.mxu0 %v203
  %v240 = vpop.f32.mrf.mxu0
  %v241 = vadd.f32 %v171, %v240
  %242 = vmatmul.f32.gmra.mxu0 %v206
  %v243 = vpop.f32.mrf.mxu0
  %v244 = vadd.f32 %v176, %v243
  %245 = vmatmul.f32.gmra.mxu0 %v209
  %v246 = vpop.f32.mrf.mxu0
  %v247 = vadd.f32 %v181, %v246
  %248 = vmatmul.f32.gmra.mxu0 %v212
  %v249 = vpop.f32.mrf.mxu0
  %v250 = vadd.f32 %v186, %v249
  %251 = vmatmul.f32.gmra.mxu0 %v215
  %v252 = vpop.f32.mrf.mxu0
  %v253 = vadd.f32 %v191, %v252
  %254 = vmatmul.f32.gmra.mxu0 %v218
  %v255 = vpop.f32.mrf.mxu0
  %v256 = vadd.f32 %v196, %v255
  %257 = vdwg.mxu0
  %v258 = vtanh.pop %v238
  %v259 = vtanh.pop %v241
  %v260 = vtanh.pop %v244
  %v261 = vtanh.pop %v247
  %v262 = vtanh.pop %v250
  %v263 = vtanh.pop %v253
  %v264 = vtanh.pop %v256
  %266 = vset.pattern.permute.xlu0 0
  %267 = vperm.xlu0 %266, %v55
  %v268 = vpop.permute.xlu0 %267
  %v271 = vsel %vm198, %v40, 0
  %273 = vmatpush.msra.mxu0 0.0
  %274 = vmatpush.msra.mxu0 0.0
  %275 = vmatpush.msra.mxu0 0.0
  %276 = vmatpush.msra.mxu0 0.0
  %277 = vmatpush.msra.mxu0 0.0
  %278 = vmatpush.msra.mxu0 0.0
  %279 = vmatpush.msra.mxu0 0.0
  %280 = vmatpush.msra.mxu0 0.0
  %281 = vmatpush.msra.mxu0 0.0
  %282 = vmatpush.msra.mxu0 %v264
  %283 = vmatpush.msra.mxu0 %v263
  %284 = vmatpush.msra.mxu0 %v262
  %285 = vmatpush.msra.mxu0 %v261
  %286 = vmatpush.msra.mxu0 %v260
  %287 = vmatpush.msra.mxu0 %v259
  %288 = vmatpush.msra.mxu0 %v258
  %289 = vmatmul.f32.gmra.mxu0 %v271
  %v290 = vpop.f32.mrf.mxu0
  %v291 = vadd.f32 %v268, %v290
  %292 = vdwg.mxu0
  %293 = vst [vmem:[%s7] sm:$0x3] %v291
  // Predicated region
  $region30: #{dnn_forward.1} parent=0 // pred_check
    _
  $region31: #{dnn_forward.1} parent=0 // pred_check_branch
    %295 = sbr.rel (0) target = $region33
  $region32: #{dnn_forward.1} parent=0 // pred_region
    _
  $region33: #{dnn_forward.1} parent=0 // pred_fallthru
    _
  // Predicated region
  $region34: #{dnn_forward.1} parent=0 // pred_check
    _
  $region35: #{dnn_forward.1} parent=0 // pred_check_branch
    %297 = sbr.rel (0) target = $region37
  $region36: #{dnn_forward.1} parent=0 // pred_region
    _
  $region37: #{dnn_forward.1} parent=0 // pred_fallthru
    _

</llo_original>
